<compile_context>
chip_gen: v7x
topology: tpu7x:2x2x1
jax: 0.10.0
libtpu: 0.0.40
codegen_flags: <defaults>
</compile_context>

<pallas_src>
import math

import jax
import jax.numpy as jnp
from jax.experimental import pallas as pl
from jax.experimental.pallas import tpu as pltpu

_LANE = 128
_DEFAULT_BLOCK_BYTES = 4 * 1024 * 1024  # ~4 MiB blocks; double-buffered fits all gens


def _jumprelu_kernel(x_ref, thr_ref, o_ref):
    x = x_ref[...]                        # (tile_b, tile_h), x.dtype
    thr = thr_ref[...]                    # (1, tile_h), promoted compare dtype
    gate = x.astype(thr.dtype) > thr      # compare in promoted dtype (PyTorch parity)
    # Multiply (not jnp.where) so NaN / +-Inf below threshold and -0.0 match torch.
    o_ref[...] = x * gate.astype(x.dtype)


def _round_up(v: int, m: int) -> int:
    return ((v + m - 1) // m) * m


def _choose_tiles(B: int, H: int, itemsize: int, max_block_bytes: int):
    """H is a multiple of 128 here. Returns (tile_b, tile_h)."""
    sublane = max(8, 32 // itemsize)      # 8 f32, 16 bf16, 32 int8/fp8
    row_bytes = H * itemsize

    if sublane * row_bytes <= max_block_bytes:
        # Full-row blocks: contiguous HBM slabs, threshold DMA'd once, 1-D grid.
        tile_h = H
        if B <= sublane:
            return B, tile_h
        rows_fit = max(sublane, (max_block_bytes // row_bytes) // sublane * sublane)
        # Cap tile_b so the grid has ~8 steps -> read/compute/write overlap and
        # the v7x megacore split sees multiple steps on the parallel axis.
        target = max(_round_up(pl.cdiv(B, 8), sublane), sublane)
        tile_b = min(rows_fit, target)
        if tile_b >= B:
            tile_b = B
        return tile_b, tile_h

    # Very wide rows: split H into large multiples of 128, minimal sublane rows.
    tile_h = max(_LANE, (max_block_bytes // (sublane * itemsize)) // _LANE * _LANE)
    tile_b = sublane if B >= sublane else B
    return tile_b, tile_h


def jumprelu(x: jax.Array, threshold: jax.Array,
             *, max_block_bytes: int = _DEFAULT_BLOCK_BYTES) -> jax.Array:
    """Pallas TPU implementation of JumpReLUFunction.forward.

    x:         (B, H)
    threshold: (H,)  per-feature threshold, broadcast over batch
    returns:   (B, H), same dtype as x
    """
    B, H = x.shape
    assert threshold.shape == (H,), threshold.shape

    cmp_dtype = jnp.promote_types(x.dtype, threshold.dtype)
    thr = threshold.astype(cmp_dtype)
    itemsize = jnp.dtype(x.dtype).itemsize

    # --- make the lane (last) dim a multiple of 128 so stores are unmasked ---
    x_in, thr_in, H_in = x, thr, H
    fold_g, padded = 1, False
    if H % _LANE != 0:
        g = _LANE // math.gcd(H, _LANE)   # smallest g with (g*H) % 128 == 0
        if g > 1 and B % g == 0 and g * H * itemsize * 8 <= max_block_bytes:
            # Fold g rows into the lane dim: (B, H) -> (B/g, g*H). Layout only.
            fold_g = g
            x_in = x.reshape(B // g, g * H)
            thr_in = jnp.tile(thr, g)
            H_in = g * H
        else:
            # Pad H up to a multiple of 128 and slice the result afterwards.
            padded = True
            H_in = _round_up(H, _LANE)
            x_in = jnp.pad(x, ((0, 0), (0, H_in - H)))
            thr_in = jnp.pad(thr, (0, H_in - H))

    B_in = x_in.shape[0]
    thr2d = thr_in.reshape(1, H_in)

    tile_b, tile_h = _choose_tiles(B_in, H_in, itemsize, max_block_bytes)

    # VMEM budget from the actual tiles: 2x double-buffered (x + out) blocks,
    # double-buffered threshold, plus slack. Clamped within v7x's 64 MiB.
    block_bytes = tile_b * tile_h * itemsize
    thr_bytes = tile_h * jnp.dtype(cmp_dtype).itemsize
    vmem_limit = min(64 * 1024 * 1024,
                     max(16 * 1024 * 1024,
                         4 * block_bytes + 2 * thr_bytes + (4 << 20)))

    cost = pl.CostEstimate(
        flops=2 * B_in * H_in,
        transcendentals=0,
        bytes_accessed=2 * B_in * H_in * itemsize + H_in * jnp.dtype(cmp_dtype).itemsize,
    )

    if tile_h == H_in:
        # 1-D grid over B; threshold block index is constant (DMA'd once).
        grid = (pl.cdiv(B_in, tile_b),)
        in_specs = [
            pl.BlockSpec((tile_b, tile_h), lambda i: (i, 0)),   # x
            pl.BlockSpec((1, tile_h), lambda i: (0, 0)),        # threshold
        ]
        out_spec = pl.BlockSpec((tile_b, tile_h), lambda i: (i, 0))
        dim_sem = ("parallel",)
    else:
        # Huge H: H-tiles outer so the threshold block stays resident across
        # the inner batch sweep.
        grid = (pl.cdiv(H_in, tile_h), pl.cdiv(B_in, tile_b))
        in_specs = [
            pl.BlockSpec((tile_b, tile_h), lambda j, i: (i, j)),  # x
            pl.BlockSpec((1, tile_h), lambda j, i: (0, j)),       # threshold
        ]
        out_spec = pl.BlockSpec((tile_b, tile_h), lambda j, i: (i, j))
        dim_sem = ("parallel", "parallel")

    # TODO(synk): expose input_output_aliases for callers that can donate x
    # (removes the separate HBM output allocation; semantics-neutral otherwise).
    out = pl.pallas_call(
        _jumprelu_kernel,
        out_shape=jax.ShapeDtypeStruct((B_in, H_in), x.dtype),
        grid=grid,
        in_specs=in_specs,
        out_specs=out_spec,
        compiler_params=pltpu.CompilerParams(
            dimension_semantics=dim_sem,
            vmem_limit_bytes=int(vmem_limit),
        ),
        cost_estimate=cost,
    )(x_in, thr2d)

    if fold_g > 1:
        out = out.reshape(B, H)
    elif padded:
        out = out[:, :H]
    return out


if __name__ == "__main__":
    key = jax.random.PRNGKey(0)
    kx, kt = jax.random.split(key)

    def ref_fn(x, thr):
        gate = (x.astype(jnp.promote_types(x.dtype, thr.dtype)) > thr[None, :])
        return x * gate.astype(x.dtype)

    # 1) f32, H a multiple of 128 (direct lane-dense path)
    B, H = 16, 256
    x = jax.random.normal(kx, (B, H), dtype=jnp.float32)
    thr = jnp.abs(jax.random.normal(kt, (H,), dtype=jnp.float32)) * 0.5
    out = jax.block_until_ready(jumprelu(x, thr))
    assert out.shape == (B, H) and out.dtype == x.dtype
    assert jnp.array_equal(out, ref_fn(x, thr)), "f32 mismatch"

    # 2) bf16 activations, f32 threshold (promoted compare)
    xb = x.astype(jnp.bfloat16)
    outb = jax.block_until_ready(jumprelu(xb, thr))
    assert outb.dtype == jnp.bfloat16
    assert jnp.array_equal(outb, ref_fn(xb, thr)), "bf16 mismatch"

    # 3) small H (32): lane-dense fold path (4 rows folded into the lane dim)
    B2, H2 = 16, 32
    x2 = jax.random.normal(kx, (B2, H2), dtype=jnp.float32)
    thr2 = jnp.abs(jax.random.normal(kt, (H2,), dtype=jnp.float32)) * 0.5
    out2 = jax.block_until_ready(jumprelu(x2, thr2))
    assert jnp.array_equal(out2, ref_fn(x2, thr2)), "fold-path mismatch"

    # 4) non-128-multiple H with B not divisible by the fold factor: pad path
    B3, H3 = 8, 100
    x3 = jax.random.normal(kx, (B3, H3), dtype=jnp.float32)
    thr3 = jnp.abs(jax.random.normal(kt, (H3,), dtype=jnp.float32)) * 0.5
    out3 = jax.block_until_ready(jumprelu(x3, thr3))
    assert out3.shape == (B3, H3)
    assert jnp.array_equal(out3, ref_fn(x3, thr3)), "pad-path mismatch"

    print("KERNEL_OK")
</pallas_src>

<mosaic_0001>
module attributes {stable_mosaic.version = 11 : i64} {
  func.func @_jumprelu_kernel(%arg0: i32, %arg1: memref<8x256xf32, #tpu.memory_space<vmem>>, %arg2: memref<1x256xf32, #tpu.memory_space<vmem>>, %arg3: memref<8x256xf32, #tpu.memory_space<vmem>>) attributes {dimension_semantics = [#tpu.dimension_semantics<parallel>], iteration_bounds = array<i64: 2>, scalar_prefetch = 0 : i64, scratch_operands = 0 : i64, tpu.core_type = #tpu.core_type<tc>, window_params = [{transform_indices = @transform_0, window_bounds = array<i64: 8, 256>}, {pipeline_mode = #tpu.pipeline_mode<synchronous>, transform_indices = @transform_1, window_bounds = array<i64: 1, 256>}, {transform_indices = @transform_2, window_bounds = array<i64: 8, 256>}]} {
    %c0 = arith.constant 0 : index
    %c0_0 = arith.constant 0 : index
    %0 = vector.load %arg1[%c0, %c0_0] : memref<8x256xf32, #tpu.memory_space<vmem>>, vector<8x256xf32>
    %c0_1 = arith.constant 0 : index
    %c0_2 = arith.constant 0 : index
    %1 = vector.load %arg2[%c0_1, %c0_2] : memref<1x256xf32, #tpu.memory_space<vmem>>, vector<1x256xf32>
    %2 = vector.broadcast %1 : vector<1x256xf32> to vector<8x256xf32>
    %3 = arith.cmpf ogt, %0, %2 : vector<8x256xf32>
    %4 = arith.extui %3 : vector<8x256xi1> to vector<8x256xi32>
    %5 = arith.sitofp %4 : vector<8x256xi32> to vector<8x256xf32>
    %6 = arith.mulf %0, %5 : vector<8x256xf32>
    %c0_3 = arith.constant 0 : index
    %c0_4 = arith.constant 0 : index
    %7 = vector.load %arg3[%c0_3, %c0_4] : memref<8x256xf32, #tpu.memory_space<vmem>>, vector<8x256xf32>
    tpu.vector_store %arg3[%c0_3, %c0_4], %6 {strides = array<i32>} : memref<8x256xf32, #tpu.memory_space<vmem>>, vector<8x256xf32>,
    return
  }
  func.func @transform_0(%arg0: i32) -> (i32, i32) {
    %c0_i32 = arith.constant 0 : i32
    %c0_i32_0 = arith.constant 0 : i32
    return %arg0, %c0_i32 : i32, i32
  }
  func.func @transform_1(%arg0: i32) -> (i32, i32) {
    %c0_i32 = arith.constant 0 : i32
    %c0_i32_0 = arith.constant 0 : i32
    %c0_i32_1 = arith.constant 0 : i32
    return %c0_i32, %c0_i32_0 : i32, i32
  }
  func.func @transform_2(%arg0: i32) -> (i32, i32) {
    %c0_i32 = arith.constant 0 : i32
    %c0_i32_0 = arith.constant 0 : i32
    return %arg0, %c0_i32 : i32, i32
  }
}

</mosaic_0001>

<llo_original>
// kernel: tpu_custom_call.1
$region0: #{tpu_custom_call.1}
  #allocation0 [shape = 'u32[]', space=smem, size = 0x4, offset = 0x4, fixed_abs, tag = 'smem constant byte address 0x4 - core index']
  #allocation1 [shape = 'u32[144,128]{1,0:T(1,128)}', space=vmem, size = 0x12000, scoped, tag = 'internal scratch']
  %s0 = inlined_call_operand.hbm [shape: f32[16,256], index: 0, kind: input, shape index: {}]
  %s1 = inlined_call_operand.vmem [shape: f32[1,256], index: 1, kind: input, shape index: {}]
  %s2 = inlined_call_operand.hbm [shape: f32[16,256], index: 2, kind: output, shape index: {}]
  %s3 = sld [smem:[#allocation0]]
  $region45: #{tpu_custom_call.1} parent=0
    _
  %s5 = ssub.s32 1, %s3
  %s6 = scalar_select 0, %s5, %s3
  $region1: #{tpu_custom_call.1} parent=0
    #allocation2 [shape = 'u8[16384]{0}', space=vmem, size = 0x4000, scoped, tag = 'input window, operand 0']
    #allocation3 [shape = 's32[2]{0}', space=sflag, size = 0x8, scoped, tag = 'scoped memory for tpu_custom_call.1']
    #allocation4 [shape = 's32[2]{0}', space=sflag, size = 0x8, scoped, tag = 'scoped memory for tpu_custom_call.1']
    #allocation5 [shape = 'u8[16384]{0}', space=vmem, size = 0x4000, scoped, tag = 'output window, operand 0']
    %7 = vsyncpa [#allocation3], 0
    %s8 = scalar_lea.sflag [#allocation3], 1
    %9 = vsyncpa %s8, 0
    %10 = vsyncpa [#allocation4], 0
    %s11 = scalar_lea.sflag [#allocation4], 1
    %12 = vsyncpa %s11, 0
    loop: start=0, step=1, limit=4
    $region2: #{tpu_custom_call.1} parent=1 // loop_pre_header
      _
    $region3: #{tpu_custom_call.1} parent=1 // loop_header
      %s14 = sphi 0, %s18
      %p15 = scmp.ge.s32.totalorder %s14, 4
      %s24 = sphi 0, %s26
      %s27 = sphi 0, %s24
      %s28 = sphi 0, %s27
      %s44 = sphi 0, %s28
      %s48 = sphi 0, %s48
      %s50 = sphi 0, %s48
      %s51 = sphi 0, %s50
      %s65 = sphi 0, %s51
      %s71 = sphi 0, %s73
      %s74 = sphi 0, %s71
      %s75 = sphi 0, %s74
      %s91 = sphi 0, %s75
    $region4: #{tpu_custom_call.1} parent=1 // loop_header_branch
      %17 = sbr.rel (%p15) target = $region8
    $region5: #{tpu_custom_call.1} parent=1 // loop_body
      %s19 = ssub.s32 %s14, 1
      %s20 = ssub.s32 %s14, 2
      %s21 = sadd.s32 %s14, 1
      %s22 = ssub.s32 %s14, %s21
      %p23 = scmp.eq.s32.totalorder %s22, 0
      %s25 = sadd.s32 %s24, 1
      %s26 = scalar_select %p23, %s24, %s25
      %p29 = pneg %p23
      %p30 = scmp.eq.s32.totalorder %s14, 1
      %p31 = por %p29, %p30
      %p32 = scmp.ne.s32.totalorder %s24, %s27
      %p33 = scmp.eq.s32.totalorder %s14, 0
      %p34 = por %p32, %p33
      %p35 = scmp.ne.s32.totalorder %s24, %s27
      %p36 = scmp.eq.s32.totalorder %s19, 1
      %p37 = por %p35, %p36
      %p38 = scmp.ne.s32.totalorder %s27, %s28
      %p39 = scmp.eq.s32.totalorder %s19, 0
      %p40 = por %p38, %p39
      %p41 = scmp.ne.s32.totalorder %s27, %s28
      %p42 = scmp.eq.s32.totalorder %s20, 1
      %p43 = por %p41, %p42
      %p45 = scmp.ne.s32.totalorder %s28, %s44
      %p46 = scmp.eq.s32.totalorder %s20, 0
      %p47 = por %p45, %p46
      %s49 = sadd.s32 %s48, 1
      %p52 = scmp.eq.s32.totalorder %s14, 1
      %p53 = scmp.ne.s32.totalorder %s48, %s50
      %p54 = scmp.eq.s32.totalorder %s14, 0
      %p55 = por %p53, %p54
      %p56 = scmp.ne.s32.totalorder %s48, %s50
      %p57 = scmp.eq.s32.totalorder %s19, 1
      %p58 = por %p56, %p57
      %p59 = scmp.ne.s32.totalorder %s50, %s51
      %p60 = scmp.eq.s32.totalorder %s19, 0
      %p61 = por %p59, %p60
      %p62 = scmp.ne.s32.totalorder %s50, %s51
      %p63 = scmp.eq.s32.totalorder %s20, 1
      %p64 = por %p62, %p63
      %p66 = scmp.ne.s32.totalorder %s51, %s65
      %p67 = scmp.eq.s32.totalorder %s20, 0
      %p68 = por %p66, %p67
      %s69 = ssub.s32 %s14, %s21
      %p70 = scmp.eq.s32.totalorder %s69, 0
      %s72 = sadd.s32 %s71, 1
      %s73 = scalar_select %p70, %s71, %s72
      %p76 = pneg %p70
      %p77 = scmp.eq.s32.totalorder %s14, 1
      %p78 = por %p76, %p77
      %p79 = scmp.ne.s32.totalorder %s71, %s74
      %p80 = scmp.eq.s32.totalorder %s14, 0
      %p81 = por %p79, %p80
      %p82 = scmp.ne.s32.totalorder %s71, %s74
      %p83 = scmp.eq.s32.totalorder %s19, 1
      %p84 = por %p82, %p83
      %p85 = scmp.ne.s32.totalorder %s74, %s75
      %p86 = scmp.eq.s32.totalorder %s19, 0
      %p87 = por %p85, %p86
      %p88 = scmp.ne.s32.totalorder %s74, %s75
      %p89 = scmp.eq.s32.totalorder %s20, 1
      %p90 = por %p88, %p89
      %p92 = scmp.ne.s32.totalorder %s75, %s91
      %p93 = scmp.eq.s32.totalorder %s20, 0
      %p94 = por %p92, %p93
      %p95 = scmp.le.s32.totalorder 1, %s14
      %p96 = scmp.lt.s32.totalorder %s14, 3
      %p97 = pnand %p95, %p96
      %p98 = pneg %p97
      // Predicated region
      $region9: #{tpu_custom_call.1} parent=5 // pred_check
        _
      $region10: #{tpu_custom_call.1} parent=5 // pred_check_branch
        %100 = sbr.rel (%p97) target = $region12
      $region11: #{tpu_custom_call.1} parent=5 // pred_region
        %s101 = ssub.s32 %s14, 1
        // Predicated region
        $region13: #{tpu_custom_call.1} parent=11 // pred_check
          %p102 = pneg %p61
        $region14: #{tpu_custom_call.1} parent=11 // pred_check_branch
          %104 = sbr.rel (%p102) target = $region16
        $region15: #{tpu_custom_call.1} parent=11 // pred_region
          _
        $region16: #{tpu_custom_call.1} parent=11 // pred_fallthru
          _
      $region12: #{tpu_custom_call.1} parent=5 // pred_fallthru
        _
      %p105 = scmp.lt.s32.totalorder %s14, 2
      // Predicated region
      $region17: #{tpu_custom_call.1} parent=5 // pred_check
        %p106 = pneg %p105
      $region18: #{tpu_custom_call.1} parent=5 // pred_check_branch
        %108 = sbr.rel (%p106) target = $region20
      $region19: #{tpu_custom_call.1} parent=5 // pred_region
        // Predicated region
        $region21: #{tpu_custom_call.1} parent=19 // pred_check
          %p109 = pneg %p34
        $region22: #{tpu_custom_call.1} parent=19 // pred_check_branch
          %111 = sbr.rel (%p109) target = $region24
        $region23: #{tpu_custom_call.1} parent=19 // pred_region
          %s112 = sand.u32 %s24, 1
          %s113 = scalar_lea.sflag [#allocation3], %s112
          %s114 = sand.u32 %s24, 1
          %s115 = smul.addr %s114, 16
          %s116 = scalar_lea.vmem [#allocation2], %s115
          %s118 = ssub.s32 256, 256
          %119 = vsyncadd %s113, %s118
          %s120 = smul.addr %s14, 2
          %s121 = smul.addr %s120, 128
          %s122 = scalar_lea.hbm %s0, %s121
          %s124 = sshll.u32 %s116, 4
          %s125 = int_to_ptr.vmem [resolvable:$true] %s124
          %127 = dma.hbm_to_vmem [thread:$0]  %s122, 256, %s125, %s113
        $region24: #{tpu_custom_call.1} parent=19 // pred_fallthru
          _
      $region20: #{tpu_custom_call.1} parent=5 // pred_fallthru
        _
      %p128 = scmp.le.s32.totalorder 1, %s14
      %p129 = scmp.lt.s32.totalorder %s14, 3
      %p130 = pnand %p128, %p129
      %p131 = pneg %p130
      // Predicated region
      $region25: #{tpu_custom_call.1} parent=5 // pred_check
        _
      $region26: #{tpu_custom_call.1} parent=5 // pred_check_branch
        %133 = sbr.rel (%p130) target = $region28
      $region27: #{tpu_custom_call.1} parent=5 // pred_region
        %s134 = ssub.s32 %s14, 1
        %s135 = sand.u32 %s27, 1
        %s136 = scalar_lea.sflag [#allocation3], %s135
        %s137 = sand.u32 %s27, 1
        %s138 = smul.addr %s137, 16
        %s139 = scalar_lea.vmem [#allocation2], %s138
        // Predicated region
        $region29: #{tpu_custom_call.1} parent=27 // pred_check
          %p140 = pneg %p40
        $region30: #{tpu_custom_call.1} parent=27 // pred_check_branch
          %142 = sbr.rel (%p140) target = $region32
        $region31: #{tpu_custom_call.1} parent=27 // pred_region
          %143 = dma.done %s136, 256
        $region32: #{tpu_custom_call.1} parent=27 // pred_fallthru
          _
        %s144 = sand.u32 %s27, 1
        %s145 = scalar_lea.sflag [#allocation3], %s144
        %s146 = sand.u32 %s27, 1
        %s147 = smul.addr %s146, 16
        %s148 = scalar_lea.vmem [#allocation2], %s147
        %p149 = pneg %p40
        %p150 = pneg %p37
        %p151 = pneg %p61
        %p152 = pneg %p58
        %p153 = pneg %p87
        %p154 = pneg %p84
        %s155 = sand.u32 %s74, 1
        %s156 = scalar_lea.sflag [#allocation4], %s155
        %s157 = sand.u32 %s74, 1
        %s158 = smul.addr %s157, 16
        %s159 = scalar_lea.vmem [#allocation5], %s158
        %v160 = vld [vmem:[%s139] sm:$0xff]
        %v161 = vld [vmem:[%s139 + $0x8] sm:$0xff]
        %v162 = vld [vmem:[%s1] sm:$0x3]
        %v164 = vlaneseq
        %v165 = vshrl.u32 %v164, 7
        %v166 = vsub.s32 0, %v165
        %v167 = vrot.slane %v162, %v166
        %v168 = vlaneseq
        %v169 = vshrl.u32 %v168, 7
        %v170 = vsub.s32 1, %v169
        %v171 = vrot.slane %v162, %v170
        %vm174 = vcmp.gt.f32.partialorder %v160, %v167
        %vm175 = vcmp.gt.f32.partialorder %v161, %v171
        %v176 = vsel %vm174, 1, 0
        %v177 = vsel %vm175, 1, 0
        %v178 = vcvt.s32.f32 %v176
        %v179 = vcvt.s32.f32 %v177
        %v180 = vmul.f32 %v160, %v178
        %v181 = vmul.f32 %v161, %v179
        %182 = vst [vmem:[%s159] sm:$0xff] %v180
        %183 = vst [vmem:[%s159 + $0x8] sm:$0xff] %v181
        %s184 = sand.u32 %s74, 1
        %s185 = scalar_lea.sflag [#allocation4], %s184
        %s186 = sand.u32 %s74, 1
        %s187 = smul.addr %s186, 16
        %s188 = scalar_lea.vmem [#allocation5], %s187
        // Predicated region
        $region33: #{tpu_custom_call.1} parent=27 // pred_check
          %p189 = pneg %p84
        $region34: #{tpu_custom_call.1} parent=27 // pred_check_branch
          %191 = sbr.rel (%p189) target = $region36
        $region35: #{tpu_custom_call.1} parent=27 // pred_region
          %s193 = ssub.s32 256, 256
          %194 = vsyncadd %s185, %s193
          %s195 = smul.addr %s19, 2
          %s196 = smul.addr %s195, 128
          %s197 = scalar_lea.hbm %s2, %s196
          %s199 = sshll.u32 %s188, 4
          %s200 = int_to_ptr.vmem [resolvable:$true] %s199
          %202 = dma.vmem_to_hbm [thread:$0]  %s200, 256, %s197, %s185
        $region36: #{tpu_custom_call.1} parent=27 // pred_fallthru
          _
      $region28: #{tpu_custom_call.1} parent=5 // pred_fallthru
        _
      %p203 = scmp.le.s32.totalorder 2, %s14
      // Predicated region
      $region37: #{tpu_custom_call.1} parent=5 // pred_check
        %p204 = pneg %p203
      $region38: #{tpu_custom_call.1} parent=5 // pred_check_branch
        %206 = sbr.rel (%p204) target = $region40
      $region39: #{tpu_custom_call.1} parent=5 // pred_region
        %s207 = ssub.s32 %s14, 2
        // Predicated region
        $region41: #{tpu_custom_call.1} parent=39 // pred_check
          %p208 = pneg %p90
        $region42: #{tpu_custom_call.1} parent=39 // pred_check_branch
          %210 = sbr.rel (%p208) target = $region44
        $region43: #{tpu_custom_call.1} parent=39 // pred_region
          %s211 = sand.u32 %s75, 1
          %s212 = scalar_lea.sflag [#allocation4], %s211
          %s213 = sand.u32 %s75, 1
          %s214 = smul.addr %s213, 16
          %s215 = scalar_lea.vmem [#allocation5], %s214
          %216 = dma.done %s212, 256
        $region44: #{tpu_custom_call.1} parent=39 // pred_fallthru
          _
      $region40: #{tpu_custom_call.1} parent=5 // pred_fallthru
        _
    $region6: #{tpu_custom_call.1} parent=1 // loop_footer
      %s18 = sadd.s32 1, %s14
    $region7: #{tpu_custom_call.1} parent=1 // loop_footer_branch
      %13 = sbr.rel target = $region3
    $region8: #{tpu_custom_call.1} parent=1 // loop_exit
      _
    %217 = vsyncpa [#allocation3], 1
    %s218 = scalar_lea.sflag [#allocation3], 1
    %219 = vsyncpa %s218, 1
    %220 = vsyncpa [#allocation4], 1
    %s221 = scalar_lea.sflag [#allocation4], 1
    %222 = vsyncpa %s221, 1

</llo_original>
